<compile_context>
chip_gen: v6e
topology: v6e:2x2x1
jax: 0.10.0
libtpu: 0.0.40
codegen_flags: <defaults>
</compile_context>

<pallas_src>
import functools

import jax
import jax.numpy as jnp
from jax.experimental import pallas as pl
from jax.experimental.pallas import tpu as pltpu

_SUBLANE = 8
_LANE_CANDIDATES = (512, 256, 128)
_TARGET_BLOCK_BYTES = 2 << 20   # ~2 MiB per (f32) input per block
_NUM_SPLITS = 2                 # engage both TCs on v7x; cheap outer loop elsewhere
_VMEM_LIMIT_BYTES = 32 << 20


def _masked_mse_kernel(a_ref, b_ref, m_ref, out_ref, acc_ref, *,
                       valid_rows, block_rows, tiles_per_split, num_splits):
    split = pl.program_id(0)
    step = pl.program_id(1)

    @pl.when(step == 0)
    def _():
        acc_ref[...] = jnp.zeros_like(acc_ref)

    # Cast in-kernel (inputs stay narrow in HBM if they arrive as bf16 / int8).
    a = a_ref[...].astype(jnp.float32)
    b = b_ref[...].astype(jnp.float32)
    m = m_ref[...].astype(jnp.float32)
    d = a - b
    vals = d * d * m                                   # (block_rows, lane) f32

    # Mask rows past the end of the slab.  Only emitted (static check) when the
    # grid covers more rows than exist (partial last block / ragged core split).
    covered_rows = num_splits * tiles_per_split * block_rows
    if covered_rows != valid_rows:
        row0 = (split * tiles_per_split + step) * block_rows
        row_idx = row0 + jax.lax.broadcasted_iota(jnp.int32, vals.shape, 0)
        vals = jnp.where(row_idx < valid_rows, vals, 0.0)

    # Elementwise (VPU-only) fold of the big block onto the (8, lane) vector
    # accumulator; no cross-lane work inside the hot loop.
    lane = acc_ref.shape[1]
    acc_ref[...] += jnp.sum(vals.reshape(-1, _SUBLANE, lane), axis=0)

    # Single XLU reduce to a scalar, only on the final reduction step.
    @pl.when(step == pl.num_programs(1) - 1)
    def _():
        out_ref[...] = jnp.sum(acc_ref[...]).reshape(1, 1, 1)


def masked_mse_loss(img1, img2, mask):
    """sum(((img1 - img2) ** 2) * mask), accumulated in f32 (PyTorch semantics)."""
    a = img1.reshape(-1)
    b = img2.reshape(-1)
    m = mask.reshape(-1)
    n = a.shape[0]

    # Widest lane width such that n is a whole number of (8, lane) vreg tiles;
    # the reshape below is then layout-free (no extra HBM copy).
    lane = next((c for c in _LANE_CANDIDATES if n % (c * _SUBLANE) == 0), None)
    if lane is None:
        # Ragged fallback only: pad to whole (8, 128) tiles (one extra copy).
        # Zero padding contributes 0 to the sum (diff = 0 and mask = 0).
        lane = 128
        pad = (-n) % (lane * _SUBLANE)
        a = jnp.pad(a, (0, pad))
        b = jnp.pad(b, (0, pad))
        m = jnp.pad(m, (0, pad))

    rows = a.shape[0] // lane            # divisible by _SUBLANE
    a2 = a.reshape(rows, lane)
    b2 = b.reshape(rows, lane)
    m2 = m.reshape(rows, lane)

    # Big blocks: ~2 MiB per f32 input per step (1024-4096 rows depending on lane).
    block_rows = min(rows, max(_SUBLANE,
                               (_TARGET_BLOCK_BYTES // (lane * 4)) // _SUBLANE * _SUBLANE))
    num_row_blocks = pl.cdiv(rows, block_rows)

    num_splits = min(_NUM_SPLITS, num_row_blocks)
    tiles_per_split = pl.cdiv(num_row_blocks, num_splits)
    covered_blocks = num_splits * tiles_per_split

    if covered_blocks == num_row_blocks:
        # Exact cover: keep the index_map a plain affine function.
        def in_map(i, j):
            return (i * tiles_per_split + j, 0)
    else:
        # Ragged cover: clamp so fully out-of-range steps re-read the last
        # valid block; their contribution is masked to zero inside the kernel.
        def in_map(i, j):
            return (jnp.minimum(i * tiles_per_split + j, num_row_blocks - 1), 0)

    tile_spec = pl.BlockSpec((block_rows, lane), in_map)

    kernel = functools.partial(
        _masked_mse_kernel,
        valid_rows=rows,
        block_rows=block_rows,
        tiles_per_split=tiles_per_split,
        num_splits=num_splits,
    )

    partials = pl.pallas_call(
        kernel,
        out_shape=jax.ShapeDtypeStruct((num_splits, 1, 1), jnp.float32),
        grid_spec=pltpu.PrefetchScalarGridSpec(
            num_scalar_prefetch=0,
            grid=(num_splits, tiles_per_split),
            in_specs=[tile_spec, tile_spec, tile_spec],
            out_specs=pl.BlockSpec((1, 1, 1), lambda i, j: (i, 0, 0)),
            scratch_shapes=[pltpu.VMEM((_SUBLANE, lane), jnp.float32)],
        ),
        compiler_params=pltpu.CompilerParams(
            dimension_semantics=("parallel", "arbitrary"),
            vmem_limit_bytes=_VMEM_LIMIT_BYTES,
        ),
    )(a2, b2, m2)

    return jnp.sum(partials)


if __name__ == "__main__":
    key = jax.random.PRNGKey(0)
    k1, k2, k3 = jax.random.split(key, 3)

    B, C, H, W = 2, 4, 16, 16
    img1 = jax.random.normal(k1, (B, C, H, W), dtype=jnp.float32)
    img2 = jax.random.normal(k2, (B, C, H, W), dtype=jnp.float32)
    # Deterministic binary mask (the module's __init__ takes an arbitrary mask;
    # its non_zero_count attribute is unused by forward).
    mask = (jax.random.uniform(k3, (B, C, H, W)) > 0.5).astype(jnp.float32)

    loss = masked_mse_loss(img1, img2, mask)
    jax.block_until_ready(loss)

    # Reference check in plain JAX (mirrors the PyTorch forward exactly).
    ref = jnp.sum(((img1 - img2) ** 2) * mask)
    assert jnp.allclose(loss, ref, rtol=1e-5, atol=1e-5), (loss, ref)

    print("KERNEL_OK")
</pallas_src>

<mosaic_0001>
module attributes {stable_mosaic.version = 11 : i64} {
  func.func @_masked_mse_kernel(%arg0: i32, %arg1: i32, %arg2: memref<8x256xf32, #tpu.memory_space<vmem>>, %arg3: memref<8x256xf32, #tpu.memory_space<vmem>>, %arg4: memref<8x256xf32, #tpu.memory_space<vmem>>, %arg5: memref<1x1x1xf32, #tpu.memory_space<vmem>>, %arg6: memref<8x256xf32, #tpu.memory_space<vmem>>) attributes {dimension_semantics = [#tpu.dimension_semantics<parallel>, #tpu.dimension_semantics<arbitrary>], iteration_bounds = array<i64: 1, 1>, scalar_prefetch = 0 : i64, scratch_operands = 1 : i64, tpu.core_type = #tpu.core_type<tc>, window_params = [{transform_indices = @transform_0, window_bounds = array<i64: 8, 256>}, {transform_indices = @transform_1, window_bounds = array<i64: 8, 256>}, {transform_indices = @transform_2, window_bounds = array<i64: 8, 256>}, {transform_indices = @transform_3, window_bounds = array<i64: 1, 1, 1>}]} {
    %c0_i32 = arith.constant 0 : i32
    %0 = arith.cmpi eq, %arg1, %c0_i32 : i32
    %1 = arith.extui %0 : i1 to i32
    %c0_i32_0 = arith.constant 0 : i32
    %2 = arith.cmpi ne, %1, %c0_i32_0 : i32
    scf.if %2 {
      %cst_12 = arith.constant 0.000000e+00 : f32
      %17 = vector.broadcast %cst_12 : f32 to vector<8x256xf32>
      %c0_13 = arith.constant 0 : index
      %c0_14 = arith.constant 0 : index
      %18 = vector.load %arg6[%c0_13, %c0_14] : memref<8x256xf32, #tpu.memory_space<vmem>>, vector<8x256xf32>
      tpu.vector_store %arg6[%c0_13, %c0_14], %17 {strides = array<i32>} : memref<8x256xf32, #tpu.memory_space<vmem>>, vector<8x256xf32>,
    } else {
    }
    %c0 = arith.constant 0 : index
    %c0_1 = arith.constant 0 : index
    %3 = vector.load %arg2[%c0, %c0_1] : memref<8x256xf32, #tpu.memory_space<vmem>>, vector<8x256xf32>
    %c0_2 = arith.constant 0 : index
    %c0_3 = arith.constant 0 : index
    %4 = vector.load %arg3[%c0_2, %c0_3] : memref<8x256xf32, #tpu.memory_space<vmem>>, vector<8x256xf32>
    %c0_4 = arith.constant 0 : index
    %c0_5 = arith.constant 0 : index
    %5 = vector.load %arg4[%c0_4, %c0_5] : memref<8x256xf32, #tpu.memory_space<vmem>>, vector<8x256xf32>
    %6 = arith.subf %3, %4 : vector<8x256xf32>
    %7 = arith.mulf %6, %6 : vector<8x256xf32>
    %8 = arith.mulf %7, %5 : vector<8x256xf32>
    %c0_6 = arith.constant 0 : index
    %c0_7 = arith.constant 0 : index
    %9 = vector.load %arg6[%c0_6, %c0_7] : memref<8x256xf32, #tpu.memory_space<vmem>>, vector<8x256xf32>
    %10 = vector.shape_cast %8 : vector<8x256xf32> to vector<1x8x256xf32>
    %cst = arith.constant dense<0.000000e+00> : vector<8x256xf32>
    %11 = vector.multi_reduction <add>, %10, %cst [0] : vector<1x8x256xf32> to vector<8x256xf32>
    %12 = arith.addf %9, %11 : vector<8x256xf32>
    %c0_8 = arith.constant 0 : index
    %c0_9 = arith.constant 0 : index
    %13 = vector.load %arg6[%c0_8, %c0_9] : memref<8x256xf32, #tpu.memory_space<vmem>>, vector<8x256xf32>
    tpu.vector_store %arg6[%c0_8, %c0_9], %12 {strides = array<i32>} : memref<8x256xf32, #tpu.memory_space<vmem>>, vector<8x256xf32>,
    %c0_i32_10 = arith.constant 0 : i32
    %14 = arith.cmpi eq, %arg1, %c0_i32_10 : i32
    %15 = arith.extui %14 : i1 to i32
    %c0_i32_11 = arith.constant 0 : i32
    %16 = arith.cmpi ne, %15, %c0_i32_11 : i32
    scf.if %16 {
      %c0_12 = arith.constant 0 : index
      %c0_13 = arith.constant 0 : index
      %17 = vector.load %arg6[%c0_12, %c0_13] : memref<8x256xf32, #tpu.memory_space<vmem>>, vector<8x256xf32>
      %18 = vector.shape_cast %17 : vector<8x256xf32> to vector<1x8x256xf32>
      %cst_14 = arith.constant dense<0.000000e+00> : vector<1xf32>
      %19 = vector.multi_reduction <add>, %18, %cst_14 [1, 2] : vector<1x8x256xf32> to vector<1xf32>
      %20 = vector.shape_cast %19 : vector<1xf32> to vector<1x1x1xf32>
      %21 = vector.extract %20[0, 0, 0] : f32 from vector<1x1x1xf32>
      %22 = vector.broadcast %21 : f32 to vector<1x1x1xf32>
      %c0_15 = arith.constant 0 : index
      %c0_16 = arith.constant 0 : index
      %c0_17 = arith.constant 0 : index
      %23 = vector.load %arg5[%c0_15, %c0_16, %c0_17] : memref<1x1x1xf32, #tpu.memory_space<vmem>>, vector<1x1x1xf32>
      tpu.vector_store %arg5[%c0_15, %c0_16, %c0_17], %22 {strides = array<i32>} : memref<1x1x1xf32, #tpu.memory_space<vmem>>, vector<1x1x1xf32>,
    } else {
    }
    return
  }
  func.func @transform_0(%arg0: i32, %arg1: i32) -> (i32, i32) {
    %c1_i32 = arith.constant 1 : i32
    %0 = arith.muli %arg0, %c1_i32 : i32
    %1 = arith.addi %0, %arg1 : i32
    %c0_i32 = arith.constant 0 : i32
    %c0_i32_0 = arith.constant 0 : i32
    return %1, %c0_i32 : i32, i32
  }
  func.func @transform_1(%arg0: i32, %arg1: i32) -> (i32, i32) {
    %c1_i32 = arith.constant 1 : i32
    %0 = arith.muli %arg0, %c1_i32 : i32
    %1 = arith.addi %0, %arg1 : i32
    %c0_i32 = arith.constant 0 : i32
    %c0_i32_0 = arith.constant 0 : i32
    return %1, %c0_i32 : i32, i32
  }
  func.func @transform_2(%arg0: i32, %arg1: i32) -> (i32, i32) {
    %c1_i32 = arith.constant 1 : i32
    %0 = arith.muli %arg0, %c1_i32 : i32
    %1 = arith.addi %0, %arg1 : i32
    %c0_i32 = arith.constant 0 : i32
    %c0_i32_0 = arith.constant 0 : i32
    return %1, %c0_i32 : i32, i32
  }
  func.func @transform_3(%arg0: i32, %arg1: i32) -> (i32, i32, i32) {
    %c0_i32 = arith.constant 0 : i32
    %c0_i32_0 = arith.constant 0 : i32
    %c0_i32_1 = arith.constant 0 : i32
    return %arg0, %c0_i32, %c0_i32_0 : i32, i32, i32
  }
}

</mosaic_0001>

<llo_original>
// kernel: tpu_custom_call.1
$region0: #{tpu_custom_call.1}
  #allocation0 [shape = 'u32[]', space=smem, size = 0x4, offset = 0x4, fixed_abs, tag = 'smem constant byte address 0x4 - core index']
  #allocation1 [shape = 'u32[144,128]{1,0:T(1,128)}', space=vmem, size = 0x12000, scoped, tag = 'internal scratch']
  #allocation2 [shape = 'f32[8,256]{1,0:T(8,128)}', space=vmem, size = 0x2000, scoped, tag = 'scratch operand']
  %s0 = inlined_call_operand.hbm [shape: f32[8,256], index: 0, kind: input, shape index: {}]
  %s1 = inlined_call_operand.hbm [shape: f32[8,256], index: 1, kind: input, shape index: {}]
  %s2 = inlined_call_operand.hbm [shape: f32[8,256], index: 2, kind: input, shape index: {}]
  %s3 = inlined_call_operand.hbm [shape: f32[1,1,1], index: 3, kind: output, shape index: {}]
  %s4 = sld [smem:[#allocation0]]
  $region42: #{tpu_custom_call.1} parent=0
    _
  %s6 = ssub.s32 1, %s4
  %s7 = scalar_select 0, %s6, %s4
  $region1: #{tpu_custom_call.1} parent=0
    #allocation3 [shape = 'u8[8192]{0}', space=vmem, size = 0x2000, scoped, tag = 'input window, operand 0, single buffered']
    #allocation4 [shape = 's32[1]{0}', space=sflag, size = 0x4, scoped, tag = 'scoped memory for tpu_custom_call.1']
    #allocation5 [shape = 's32[1]{0}', space=sflag, size = 0x4, scoped, tag = 'scoped memory for tpu_custom_call.1']
    #allocation6 [shape = 'u8[8192]{0}', space=vmem, size = 0x2000, scoped, tag = 'input window, operand 1, single buffered']
    #allocation7 [shape = 's32[1]{0}', space=sflag, size = 0x4, scoped, tag = 'scoped memory for tpu_custom_call.1']
    #allocation8 [shape = 'u8[8192]{0}', space=vmem, size = 0x2000, scoped, tag = 'input window, operand 2, single buffered']
    #allocation9 [shape = 'u8[512]{0}', space=vmem, size = 0x400, scoped, tag = 'output window, operand 0, single buffered']
    %8 = vsyncpa [#allocation4], 0
    %9 = vsyncpa [#allocation7], 0
    %10 = vsyncpa [#allocation5], 0
    // Predicated region
    $region2: #{tpu_custom_call.1} parent=1 // pred_check
      _
    $region3: #{tpu_custom_call.1} parent=1 // pred_check_branch
      %12 = sbr.rel (0) target = $region5
    $region4: #{tpu_custom_call.1} parent=1 // pred_region
      %s13 = sadd.s32 0, 0
      %s15 = ssub.s32 256, 256
      %16 = vsyncadd [#allocation4], %s15
      %s17 = smul.addr %s13, 2
      %s18 = smul.addr %s17, 128
      %s19 = scalar_lea.hbm %s0, %s18
      %s21 = sshll.u32 [#allocation3], 4
      %s22 = int_to_ptr.vmem [resolvable:$true] %s21
      %24 = dma.hbm_to_vmem [thread:$0]  %s19, 256, %s22, [#allocation4]
    $region5: #{tpu_custom_call.1} parent=1 // pred_fallthru
      _
    // Predicated region
    $region6: #{tpu_custom_call.1} parent=1 // pred_check
      _
    $region7: #{tpu_custom_call.1} parent=1 // pred_check_branch
      %26 = sbr.rel (0) target = $region9
    $region8: #{tpu_custom_call.1} parent=1 // pred_region
      %s27 = sadd.s32 0, 0
      %s29 = ssub.s32 256, 256
      %30 = vsyncadd [#allocation7], %s29
      %s31 = smul.addr %s27, 2
      %s32 = smul.addr %s31, 128
      %s33 = scalar_lea.hbm %s1, %s32
      %s35 = sshll.u32 [#allocation6], 4
      %s36 = int_to_ptr.vmem [resolvable:$true] %s35
      %38 = dma.hbm_to_vmem [thread:$0]  %s33, 256, %s36, [#allocation7]
    $region9: #{tpu_custom_call.1} parent=1 // pred_fallthru
      _
    // Predicated region
    $region10: #{tpu_custom_call.1} parent=1 // pred_check
      _
    $region11: #{tpu_custom_call.1} parent=1 // pred_check_branch
      %40 = sbr.rel (0) target = $region13
    $region12: #{tpu_custom_call.1} parent=1 // pred_region
      %s41 = sadd.s32 0, 0
      %s43 = ssub.s32 256, 256
      %44 = vsyncadd [#allocation7], %s43
      %s45 = smul.addr %s41, 2
      %s46 = smul.addr %s45, 128
      %s47 = scalar_lea.hbm %s2, %s46
      %s49 = sshll.u32 [#allocation8], 4
      %s50 = int_to_ptr.vmem [resolvable:$true] %s49
      %52 = dma.hbm_to_vmem [thread:$0]  %s47, 256, %s50, [#allocation7]
    $region13: #{tpu_custom_call.1} parent=1 // pred_fallthru
      _
    // Predicated region
    $region14: #{tpu_custom_call.1} parent=1 // pred_check
      _
    $region15: #{tpu_custom_call.1} parent=1 // pred_check_branch
      %54 = sbr.rel (0) target = $region17
    $region16: #{tpu_custom_call.1} parent=1 // pred_region
      %55 = dma.done [#allocation4], 256
    $region17: #{tpu_custom_call.1} parent=1 // pred_fallthru
      _
    // Predicated region
    $region18: #{tpu_custom_call.1} parent=1 // pred_check
      _
    $region19: #{tpu_custom_call.1} parent=1 // pred_check_branch
      %57 = sbr.rel (0) target = $region21
    $region20: #{tpu_custom_call.1} parent=1 // pred_region
      %58 = dma.done [#allocation7], 256
    $region21: #{tpu_custom_call.1} parent=1 // pred_fallthru
      _
    // Predicated region
    $region22: #{tpu_custom_call.1} parent=1 // pred_check
      _
    $region23: #{tpu_custom_call.1} parent=1 // pred_check_branch
      %60 = sbr.rel (0) target = $region25
    $region24: #{tpu_custom_call.1} parent=1 // pred_region
      %61 = dma.done [#allocation7], 256
    $region25: #{tpu_custom_call.1} parent=1 // pred_fallthru
      _
    %s62 = sadd.s32 0, 0
    %s63 = sadd.s32 0, 0
    %s64 = sadd.s32 0, 0
    %p65 = scmp.eq.s32.totalorder 0, 0
    // Predicated region
    $region26: #{tpu_custom_call.1} parent=1 // pred_check
      %p66 = pneg %p65
    $region27: #{tpu_custom_call.1} parent=1 // pred_check_branch
      %68 = sbr.rel (%p66) target = $region29
    $region28: #{tpu_custom_call.1} parent=1 // pred_region
      %69 = vst [vmem:[#allocation2] sm:$0xff] 0.0
      %70 = vst [vmem:[#allocation2 + $0x8] sm:$0xff] 0.0
    $region29: #{tpu_custom_call.1} parent=1 // pred_fallthru
      _
    %v71 = vld [vmem:[#allocation3] sm:$0xff]
    %v72 = vld [vmem:[#allocation3 + $0x8] sm:$0xff]
    %v73 = vld [vmem:[#allocation6] sm:$0xff]
    %v74 = vld [vmem:[#allocation6 + $0x8] sm:$0xff]
    %v75 = vld [vmem:[#allocation8] sm:$0xff]
    %v76 = vld [vmem:[#allocation8 + $0x8] sm:$0xff]
    %v77 = vsub.f32 %v71, %v73
    %v78 = vsub.f32 %v72, %v74
    %v79 = vmul.f32 %v77, %v77
    %v80 = vmul.f32 %v78, %v78
    %v81 = vmul.f32 %v79, %v75
    %v82 = vmul.f32 %v80, %v76
    %v83 = vld [vmem:[#allocation2] sm:$0xff]
    %v84 = vld [vmem:[#allocation2 + $0x8] sm:$0xff]
    %v85 = vadd.f32 %v81, 0.0
    %v86 = vadd.f32 %v82, 0.0
    %v87 = vadd.f32 %v83, %v85
    %v88 = vadd.f32 %v84, %v86
    %89 = vst [vmem:[#allocation2] sm:$0xff] %v87
    %90 = vst [vmem:[#allocation2 + $0x8] sm:$0xff] %v88
    // Predicated region
    $region30: #{tpu_custom_call.1} parent=1 // pred_check
      %p91 = pneg %p65
    $region31: #{tpu_custom_call.1} parent=1 // pred_check_branch
      %93 = sbr.rel (%p91) target = $region33
    $region32: #{tpu_custom_call.1} parent=1 // pred_region
      %v94 = vld [vmem:[#allocation2] sm:$0xff]
      %v95 = vld [vmem:[#allocation2 + $0x8] sm:$0xff]
      %v96 = vadd.f32 %v94, %v95
      %97 = vadd.xlane.f32.xlu0 %v96
      %v98 = vpop.xlane.xlu0 %97
      %v99 = vrot.slane %v98, 4
      %v100 = vadd.f32 %v98, %v99
      %v101 = vrot.slane %v100, 2
      %v102 = vadd.f32 %v100, %v101
      %v103 = vrot.slane %v102, 1
      %v104 = vadd.f32 %v102, %v103
      %s105 = vtos %v104
      %v106 = vstv %s105
      %vm107 = vcmask 0
      %108 = vst.msk [vmem:[#allocation9] sm:$0x1] %vm107, %v106
    $region33: #{tpu_custom_call.1} parent=1 // pred_fallthru
      _
    // Predicated region
    $region34: #{tpu_custom_call.1} parent=1 // pred_check
      _
    $region35: #{tpu_custom_call.1} parent=1 // pred_check_branch
      %110 = sbr.rel (0) target = $region37
    $region36: #{tpu_custom_call.1} parent=1 // pred_region
      %s112 = ssub.s32 16, 16
      %113 = vsyncadd [#allocation5], %s112
      %s115 = sshll.u32 [#allocation9], 4
      %s116 = int_to_ptr.vmem [resolvable:$true] %s115
      %118 = dma.vmem_to_hbm [thread:$0]  %s116, 16, %s3, [#allocation5]
    $region37: #{tpu_custom_call.1} parent=1 // pred_fallthru
      _
    // Predicated region
    $region38: #{tpu_custom_call.1} parent=1 // pred_check
      _
    $region39: #{tpu_custom_call.1} parent=1 // pred_check_branch
      %120 = sbr.rel (0) target = $region41
    $region40: #{tpu_custom_call.1} parent=1 // pred_region
      %121 = dma.done [#allocation5], 16
    $region41: #{tpu_custom_call.1} parent=1 // pred_fallthru
      _
    %122 = vsyncpa [#allocation4], 1
    %123 = vsyncpa [#allocation7], 1
    %124 = vsyncpa [#allocation5], 1

</llo_original>
